<compile_context>
chip_gen: v6e
topology: v6e:2x2x1
jax: 0.10.0
libtpu: 0.0.40
codegen_flags: <defaults>
</compile_context>

<pallas_src>
import math

import jax
import jax.numpy as jnp
from jax.experimental import pallas as pl
from jax.experimental.pallas import tpu as pltpu


def _samplenet_kernel(x_ref, w_ref, v_ref, out_ref):
    """x_ref: (t_sigma_num, D); w_ref: (3, D, D); v_ref: (3, 3, D) = [bias, gamma, beta] per layer."""
    eps = 1e-5

    def linear_bn(a, i):
        w = w_ref[i]                                   # (D, D), static leading index
        v = v_ref[i]                                   # (3, D)
        b, g, be = v[0:1, :], v[1:2, :], v[2:3, :]     # each (1, D)
        # Linear (MXU) + bias.
        h = jnp.dot(a, w, preferred_element_type=jnp.float32) + b
        # BatchNorm1d (training mode, biased variance) fused into one reduction pass.
        mu = jnp.mean(h, axis=0, keepdims=True)
        var = jnp.mean(h * h, axis=0, keepdims=True) - mu * mu
        scale = jax.lax.rsqrt(var + eps) * g
        shift = be - mu * scale
        return h * scale + shift

    a = x_ref[...]
    a = linear_bn(a, 0)
    a = jnp.where(a > 0, a, 0.2 * a)                   # LeakyReLU(0.2)
    a = linear_bn(a, 1)
    a = jnp.where(a > 0, a, 0.2 * a)                   # LeakyReLU(0.2)
    a = linear_bn(a, 2)
    out_ref[...] = jnp.tanh(a)                         # Tanh


def samplenet_forward(x, w_stack, vec_stack, t_batchsize):
    """x: (t_sigma_num, D) pre-drawn gaussian noise.
    w_stack: (3, D, D) weights stored (in, out) so y = x @ W + b.
    vec_stack: (3, 3, D) with per-layer rows [linear bias, bn gamma, bn beta]."""
    t_sigma_num, feature_dim = x.shape
    vmem = pl.BlockSpec(memory_space=pltpu.MemorySpace.VMEM)
    core = pl.pallas_call(
        _samplenet_kernel,
        out_shape=jax.ShapeDtypeStruct((t_sigma_num, feature_dim), jnp.float32),
        in_specs=[vmem, vmem, vmem],
        out_specs=vmem,
    )(x, w_stack, vec_stack)
    # a.repeat(rep, 1): cheap fusable broadcast in XLA, kept out of the kernel.
    rep = t_batchsize // t_sigma_num
    return jnp.tile(core, (rep, 1))
    # TODO(synk): if many independent SampleNet instances are evaluated, stack them on a
    # leading "parallel" batch axis so both v7x TensorCores are used.


def _reference_forward(x, w_stack, vec_stack, t_batchsize):
    """Pure-JAX reference for correctness checking (same math as the kernel)."""
    eps = 1e-5
    a = x
    for i in range(3):
        w = w_stack[i]
        b, g, be = vec_stack[i, 0:1, :], vec_stack[i, 1:2, :], vec_stack[i, 2:3, :]
        h = a @ w + b
        mu = jnp.mean(h, axis=0, keepdims=True)
        var = jnp.mean(h * h, axis=0, keepdims=True) - mu * mu
        h = (h - mu) * jax.lax.rsqrt(var + eps) * g + be
        a = jnp.where(h > 0, h, 0.2 * h) if i < 2 else jnp.tanh(h)
    rep = t_batchsize // x.shape[0]
    return jnp.tile(a, (rep, 1))


if __name__ == "__main__":
    # Module hyper-parameters (defaults of SampleNet).
    feature_dim = 64
    t_batchsize = 64
    t_var = 1
    t_sigma_num = t_batchsize // 16          # = 4

    key = jax.random.PRNGKey(0)
    kx, kw1, kb1, kw2, kb2, kw3, kb3 = jax.random.split(key, 7)

    # Internal gaussian "input" of the forward pass (detached randn * sqrt(t_var)).
    x = jax.random.normal(kx, (t_sigma_num, feature_dim), dtype=jnp.float32) * math.sqrt(t_var)

    # Deterministic parameter init (PyTorch Linear default: U(-1/sqrt(in), 1/sqrt(in));
    # BatchNorm1d: gamma=1, beta=0). Weights stored as (in, out).
    bound = 1.0 / math.sqrt(feature_dim)

    def lin_init(kw, kb):
        w = jax.random.uniform(kw, (feature_dim, feature_dim), jnp.float32, -bound, bound)
        b = jax.random.uniform(kb, (feature_dim,), jnp.float32, -bound, bound)
        return w, b

    w1, b1 = lin_init(kw1, kb1)
    w2, b2 = lin_init(kw2, kb2)
    w3, b3 = lin_init(kw3, kb3)
    ones = jnp.ones((feature_dim,), jnp.float32)
    zeros = jnp.zeros((feature_dim,), jnp.float32)

    # Packed parameter stacks: (3, D, D) weights and (3, 3, D) [bias, gamma, beta].
    w_stack = jnp.stack([w1, w2, w3], axis=0)
    vec_stack = jnp.stack([
        jnp.stack([b1, ones, zeros], axis=0),
        jnp.stack([b2, ones, zeros], axis=0),
        jnp.stack([b3, ones, zeros], axis=0),
    ], axis=0)

    out = samplenet_forward(x, w_stack, vec_stack, t_batchsize)
    out = jax.block_until_ready(out)

    ref = _reference_forward(x, w_stack, vec_stack, t_batchsize)
    assert out.shape == (t_batchsize, feature_dim)
    assert jnp.allclose(out, ref, atol=1e-5, rtol=1e-5), "mismatch vs pure-JAX reference"

    print("KERNEL_OK")
</pallas_src>

<mosaic_0001>
module attributes {stable_mosaic.version = 11 : i64} {
  func.func @_samplenet_kernel(%arg0: memref<4x64xf32, #tpu.memory_space<vmem>>, %arg1: memref<3x64x64xf32, #tpu.memory_space<vmem>>, %arg2: memref<3x3x64xf32, #tpu.memory_space<vmem>>, %arg3: memref<4x64xf32, #tpu.memory_space<vmem>>) attributes {dimension_semantics = [], scalar_prefetch = 0 : i64, scratch_operands = 0 : i64, tpu.core_type = #tpu.core_type<tc>} {
    %c0 = arith.constant 0 : index
    %c0_0 = arith.constant 0 : index
    %0 = vector.load %arg0[%c0, %c0_0] : memref<4x64xf32, #tpu.memory_space<vmem>>, vector<4x64xf32>
    %c0_1 = arith.constant 0 : index
    %c0_2 = arith.constant 0 : index
    %c0_3 = arith.constant 0 : index
    %1 = vector.load %arg1[%c0_1, %c0_2, %c0_3] : memref<3x64x64xf32, #tpu.memory_space<vmem>>, vector<1x64x64xf32>
    %2 = vector.shape_cast %1 : vector<1x64x64xf32> to vector<64x64xf32>
    %c0_4 = arith.constant 0 : index
    %c0_5 = arith.constant 0 : index
    %c0_6 = arith.constant 0 : index
    %3 = vector.load %arg2[%c0_4, %c0_5, %c0_6] : memref<3x3x64xf32, #tpu.memory_space<vmem>>, vector<1x3x64xf32>
    %4 = vector.shape_cast %3 : vector<1x3x64xf32> to vector<3x64xf32>
    %5 = vector.extract_strided_slice %4 {offsets = [0, 0], sizes = [1, 64], strides = [1, 1]} : vector<3x64xf32> to vector<1x64xf32>
    %6 = vector.extract_strided_slice %4 {offsets = [1, 0], sizes = [1, 64], strides = [1, 1]} : vector<3x64xf32> to vector<1x64xf32>
    %7 = vector.extract_strided_slice %4 {offsets = [2, 0], sizes = [1, 64], strides = [1, 1]} : vector<3x64xf32> to vector<1x64xf32>
    %cst = arith.constant dense<0.000000e+00> : vector<4x64xf32>
    %8 = tpu.matmul %0, %2, %cst {dimension_numbers = #tpu.dot_dimension_numbers<[1], [0], [0], [1], [0, 0, 1, 1], [], []>} : vector<4x64xf32>, vector<64x64xf32>, vector<4x64xf32> -> vector<4x64xf32>
    %9 = vector.broadcast %5 : vector<1x64xf32> to vector<4x64xf32>
    %10 = arith.addf %8, %9 : vector<4x64xf32>
    %cst_7 = arith.constant dense<0.000000e+00> : vector<64xf32>
    %11 = vector.multi_reduction <add>, %10, %cst_7 [0] : vector<4x64xf32> to vector<64xf32>
    %12 = vector.shape_cast %11 : vector<64xf32> to vector<1x64xf32>
    %cst_8 = arith.constant 4.000000e+00 : f32
    %13 = vector.broadcast %cst_8 : f32 to vector<1x64xf32>
    %14 = arith.divf %12, %13 : vector<1x64xf32>
    %15 = arith.mulf %10, %10 : vector<4x64xf32>
    %cst_9 = arith.constant dense<0.000000e+00> : vector<64xf32>
    %16 = vector.multi_reduction <add>, %15, %cst_9 [0] : vector<4x64xf32> to vector<64xf32>
    %17 = vector.shape_cast %16 : vector<64xf32> to vector<1x64xf32>
    %cst_10 = arith.constant 4.000000e+00 : f32
    %18 = vector.broadcast %cst_10 : f32 to vector<1x64xf32>
    %19 = arith.divf %17, %18 : vector<1x64xf32>
    %20 = arith.mulf %14, %14 : vector<1x64xf32>
    %21 = arith.subf %19, %20 : vector<1x64xf32>
    %cst_11 = arith.constant 9.99999974E-6 : f32
    %22 = vector.broadcast %cst_11 : f32 to vector<1x64xf32>
    %23 = arith.addf %21, %22 : vector<1x64xf32>
    %24 = math.rsqrt %23 : vector<1x64xf32>
    %25 = arith.mulf %24, %6 : vector<1x64xf32>
    %26 = arith.mulf %14, %25 : vector<1x64xf32>
    %27 = arith.subf %7, %26 : vector<1x64xf32>
    %28 = vector.broadcast %25 : vector<1x64xf32> to vector<4x64xf32>
    %29 = arith.mulf %10, %28 : vector<4x64xf32>
    %30 = vector.broadcast %27 : vector<1x64xf32> to vector<4x64xf32>
    %31 = arith.addf %29, %30 : vector<4x64xf32>
    %cst_12 = arith.constant 0.000000e+00 : f32
    %32 = vector.broadcast %cst_12 : f32 to vector<4x64xf32>
    %33 = arith.cmpf ogt, %31, %32 : vector<4x64xf32>
    %cst_13 = arith.constant 2.000000e-01 : f32
    %34 = vector.broadcast %cst_13 : f32 to vector<4x64xf32>
    %35 = arith.mulf %34, %31 : vector<4x64xf32>
    %36 = arith.select %33, %31, %35 : vector<4x64xi1>, vector<4x64xf32>
    %c1 = arith.constant 1 : index
    %c0_14 = arith.constant 0 : index
    %c0_15 = arith.constant 0 : index
    %37 = vector.load %arg1[%c1, %c0_14, %c0_15] : memref<3x64x64xf32, #tpu.memory_space<vmem>>, vector<1x64x64xf32>
    %38 = vector.shape_cast %37 : vector<1x64x64xf32> to vector<64x64xf32>
    %c1_16 = arith.constant 1 : index
    %c0_17 = arith.constant 0 : index
    %c0_18 = arith.constant 0 : index
    %39 = vector.load %arg2[%c1_16, %c0_17, %c0_18] : memref<3x3x64xf32, #tpu.memory_space<vmem>>, vector<1x3x64xf32>
    %40 = vector.shape_cast %39 : vector<1x3x64xf32> to vector<3x64xf32>
    %41 = vector.extract_strided_slice %40 {offsets = [0, 0], sizes = [1, 64], strides = [1, 1]} : vector<3x64xf32> to vector<1x64xf32>
    %42 = vector.extract_strided_slice %40 {offsets = [1, 0], sizes = [1, 64], strides = [1, 1]} : vector<3x64xf32> to vector<1x64xf32>
    %43 = vector.extract_strided_slice %40 {offsets = [2, 0], sizes = [1, 64], strides = [1, 1]} : vector<3x64xf32> to vector<1x64xf32>
    %cst_19 = arith.constant dense<0.000000e+00> : vector<4x64xf32>
    %44 = tpu.matmul %36, %38, %cst_19 {dimension_numbers = #tpu.dot_dimension_numbers<[1], [0], [0], [1], [0, 0, 1, 1], [], []>} : vector<4x64xf32>, vector<64x64xf32>, vector<4x64xf32> -> vector<4x64xf32>
    %45 = vector.broadcast %41 : vector<1x64xf32> to vector<4x64xf32>
    %46 = arith.addf %44, %45 : vector<4x64xf32>
    %cst_20 = arith.constant dense<0.000000e+00> : vector<64xf32>
    %47 = vector.multi_reduction <add>, %46, %cst_20 [0] : vector<4x64xf32> to vector<64xf32>
    %48 = vector.shape_cast %47 : vector<64xf32> to vector<1x64xf32>
    %cst_21 = arith.constant 4.000000e+00 : f32
    %49 = vector.broadcast %cst_21 : f32 to vector<1x64xf32>
    %50 = arith.divf %48, %49 : vector<1x64xf32>
    %51 = arith.mulf %46, %46 : vector<4x64xf32>
    %cst_22 = arith.constant dense<0.000000e+00> : vector<64xf32>
    %52 = vector.multi_reduction <add>, %51, %cst_22 [0] : vector<4x64xf32> to vector<64xf32>
    %53 = vector.shape_cast %52 : vector<64xf32> to vector<1x64xf32>
    %cst_23 = arith.constant 4.000000e+00 : f32
    %54 = vector.broadcast %cst_23 : f32 to vector<1x64xf32>
    %55 = arith.divf %53, %54 : vector<1x64xf32>
    %56 = arith.mulf %50, %50 : vector<1x64xf32>
    %57 = arith.subf %55, %56 : vector<1x64xf32>
    %cst_24 = arith.constant 9.99999974E-6 : f32
    %58 = vector.broadcast %cst_24 : f32 to vector<1x64xf32>
    %59 = arith.addf %57, %58 : vector<1x64xf32>
    %60 = math.rsqrt %59 : vector<1x64xf32>
    %61 = arith.mulf %60, %42 : vector<1x64xf32>
    %62 = arith.mulf %50, %61 : vector<1x64xf32>
    %63 = arith.subf %43, %62 : vector<1x64xf32>
    %64 = vector.broadcast %61 : vector<1x64xf32> to vector<4x64xf32>
    %65 = arith.mulf %46, %64 : vector<4x64xf32>
    %66 = vector.broadcast %63 : vector<1x64xf32> to vector<4x64xf32>
    %67 = arith.addf %65, %66 : vector<4x64xf32>
    %cst_25 = arith.constant 0.000000e+00 : f32
    %68 = vector.broadcast %cst_25 : f32 to vector<4x64xf32>
    %69 = arith.cmpf ogt, %67, %68 : vector<4x64xf32>
    %cst_26 = arith.constant 2.000000e-01 : f32
    %70 = vector.broadcast %cst_26 : f32 to vector<4x64xf32>
    %71 = arith.mulf %70, %67 : vector<4x64xf32>
    %72 = arith.select %69, %67, %71 : vector<4x64xi1>, vector<4x64xf32>
    %c2 = arith.constant 2 : index
    %c0_27 = arith.constant 0 : index
    %c0_28 = arith.constant 0 : index
    %73 = vector.load %arg1[%c2, %c0_27, %c0_28] : memref<3x64x64xf32, #tpu.memory_space<vmem>>, vector<1x64x64xf32>
    %74 = vector.shape_cast %73 : vector<1x64x64xf32> to vector<64x64xf32>
    %c2_29 = arith.constant 2 : index
    %c0_30 = arith.constant 0 : index
    %c0_31 = arith.constant 0 : index
    %75 = vector.load %arg2[%c2_29, %c0_30, %c0_31] : memref<3x3x64xf32, #tpu.memory_space<vmem>>, vector<1x3x64xf32>
    %76 = vector.shape_cast %75 : vector<1x3x64xf32> to vector<3x64xf32>
    %77 = vector.extract_strided_slice %76 {offsets = [0, 0], sizes = [1, 64], strides = [1, 1]} : vector<3x64xf32> to vector<1x64xf32>
    %78 = vector.extract_strided_slice %76 {offsets = [1, 0], sizes = [1, 64], strides = [1, 1]} : vector<3x64xf32> to vector<1x64xf32>
    %79 = vector.extract_strided_slice %76 {offsets = [2, 0], sizes = [1, 64], strides = [1, 1]} : vector<3x64xf32> to vector<1x64xf32>
    %cst_32 = arith.constant dense<0.000000e+00> : vector<4x64xf32>
    %80 = tpu.matmul %72, %74, %cst_32 {dimension_numbers = #tpu.dot_dimension_numbers<[1], [0], [0], [1], [0, 0, 1, 1], [], []>} : vector<4x64xf32>, vector<64x64xf32>, vector<4x64xf32> -> vector<4x64xf32>
    %81 = vector.broadcast %77 : vector<1x64xf32> to vector<4x64xf32>
    %82 = arith.addf %80, %81 : vector<4x64xf32>
    %cst_33 = arith.constant dense<0.000000e+00> : vector<64xf32>
    %83 = vector.multi_reduction <add>, %82, %cst_33 [0] : vector<4x64xf32> to vector<64xf32>
    %84 = vector.shape_cast %83 : vector<64xf32> to vector<1x64xf32>
    %cst_34 = arith.constant 4.000000e+00 : f32
    %85 = vector.broadcast %cst_34 : f32 to vector<1x64xf32>
    %86 = arith.divf %84, %85 : vector<1x64xf32>
    %87 = arith.mulf %82, %82 : vector<4x64xf32>
    %cst_35 = arith.constant dense<0.000000e+00> : vector<64xf32>
    %88 = vector.multi_reduction <add>, %87, %cst_35 [0] : vector<4x64xf32> to vector<64xf32>
    %89 = vector.shape_cast %88 : vector<64xf32> to vector<1x64xf32>
    %cst_36 = arith.constant 4.000000e+00 : f32
    %90 = vector.broadcast %cst_36 : f32 to vector<1x64xf32>
    %91 = arith.divf %89, %90 : vector<1x64xf32>
    %92 = arith.mulf %86, %86 : vector<1x64xf32>
    %93 = arith.subf %91, %92 : vector<1x64xf32>
    %cst_37 = arith.constant 9.99999974E-6 : f32
    %94 = vector.broadcast %cst_37 : f32 to vector<1x64xf32>
    %95 = arith.addf %93, %94 : vector<1x64xf32>
    %96 = math.rsqrt %95 : vector<1x64xf32>
    %97 = arith.mulf %96, %78 : vector<1x64xf32>
    %98 = arith.mulf %86, %97 : vector<1x64xf32>
    %99 = arith.subf %79, %98 : vector<1x64xf32>
    %100 = vector.broadcast %97 : vector<1x64xf32> to vector<4x64xf32>
    %101 = arith.mulf %82, %100 : vector<4x64xf32>
    %102 = vector.broadcast %99 : vector<1x64xf32> to vector<4x64xf32>
    %103 = arith.addf %101, %102 : vector<4x64xf32>
    %104 = math.tanh %103 : vector<4x64xf32>
    %c0_38 = arith.constant 0 : index
    %c0_39 = arith.constant 0 : index
    %105 = vector.load %arg3[%c0_38, %c0_39] : memref<4x64xf32, #tpu.memory_space<vmem>>, vector<4x64xf32>
    tpu.vector_store %arg3[%c0_38, %c0_39], %104 {strides = array<i32>} : memref<4x64xf32, #tpu.memory_space<vmem>>, vector<4x64xf32>,
    return
  }
}

</mosaic_0001>

<llo_original>
// kernel: tpu_custom_call.1
$region0: #{tpu_custom_call.1}
  #allocation0 [shape = 'u32[]', space=smem, size = 0x4, offset = 0x4, fixed_abs, tag = 'smem constant byte address 0x4 - core index']
  #allocation1 [shape = 'u32[144,128]{1,0:T(1,128)}', space=vmem, size = 0x12000, scoped, tag = 'internal scratch']
  %s0 = inlined_call_operand.hbm [shape: f32[4,64], index: 0, kind: input, shape index: {}]
  %s1 = inlined_call_operand.hbm [shape: f32[3,64,64], index: 1, kind: input, shape index: {}]
  %s2 = inlined_call_operand.hbm [shape: f32[3,3,64], index: 2, kind: input, shape index: {}]
  %s3 = inlined_call_operand.hbm [shape: f32[4,64], index: 3, kind: output, shape index: {}]
  %s4 = sld [smem:[#allocation0]]
  $region34: #{tpu_custom_call.1} parent=0
    _
  %s6 = ssub.s32 1, %s4
  %s7 = scalar_select 0, %s6, %s4
  $region1: #{tpu_custom_call.1} parent=0
    #allocation2 [shape = 'u8[2048]{0}', space=vmem, size = 0x800, scoped, tag = 'input window, operand 0, single buffered']
    #allocation3 [shape = 's32[1]{0}', space=sflag, size = 0x4, scoped, tag = 'scoped memory for tpu_custom_call.1']
    #allocation4 [shape = 's32[1]{0}', space=sflag, size = 0x4, scoped, tag = 'scoped memory for tpu_custom_call.1']
    #allocation5 [shape = 'u8[98304]{0}', space=vmem, size = 0x18000, scoped, tag = 'input window, operand 1, single buffered']
    #allocation6 [shape = 's32[1]{0}', space=sflag, size = 0x4, scoped, tag = 'scoped memory for tpu_custom_call.1']
    #allocation7 [shape = 'u8[6144]{0}', space=vmem, size = 0x1800, scoped, tag = 'input window, operand 2, single buffered']
    #allocation8 [shape = 'u8[2048]{0}', space=vmem, size = 0x800, scoped, tag = 'output window, operand 0, single buffered']
    %8 = vsyncpa [#allocation3], 0
    %9 = vsyncpa [#allocation6], 0
    %10 = vsyncpa [#allocation4], 0
    // Predicated region
    $region2: #{tpu_custom_call.1} parent=1 // pred_check
      _
    $region3: #{tpu_custom_call.1} parent=1 // pred_check_branch
      %12 = sbr.rel (0) target = $region5
    $region4: #{tpu_custom_call.1} parent=1 // pred_region
      %s14 = ssub.s32 64, 64
      %15 = vsyncadd [#allocation3], %s14
      %s17 = sshll.u32 [#allocation2], 4
      %s18 = int_to_ptr.vmem [resolvable:$true] %s17
      %20 = dma.hbm_to_vmem [thread:$0]  %s0, 64, %s18, [#allocation3]
    $region5: #{tpu_custom_call.1} parent=1 // pred_fallthru
      _
    // Predicated region
    $region6: #{tpu_custom_call.1} parent=1 // pred_check
      _
    $region7: #{tpu_custom_call.1} parent=1 // pred_check_branch
      %22 = sbr.rel (0) target = $region9
    $region8: #{tpu_custom_call.1} parent=1 // pred_region
      %s24 = ssub.s32 3072, 3072
      %25 = vsyncadd [#allocation6], %s24
      %s26 = sshll.u32 [#allocation5], 4
      %s27 = int_to_ptr.vmem [resolvable:$true] %s26
      %32 = dma.hbm_to_vmem [thread:$0]  %s1, 3072, %s27, [#allocation6], 128, 128, 8
    $region9: #{tpu_custom_call.1} parent=1 // pred_fallthru
      _
    // Predicated region
    $region10: #{tpu_custom_call.1} parent=1 // pred_check
      _
    $region11: #{tpu_custom_call.1} parent=1 // pred_check_branch
      %34 = sbr.rel (0) target = $region13
    $region12: #{tpu_custom_call.1} parent=1 // pred_region
      %s36 = ssub.s32 192, 192
      %37 = vsyncadd [#allocation6], %s36
      %s38 = sshll.u32 [#allocation7], 4
      %s39 = int_to_ptr.vmem [resolvable:$true] %s38
      %44 = dma.hbm_to_vmem [thread:$0]  %s2, 192, %s39, [#allocation6], 64, 64, 4
    $region13: #{tpu_custom_call.1} parent=1 // pred_fallthru
      _
    // Predicated region
    $region14: #{tpu_custom_call.1} parent=1 // pred_check
      _
    $region15: #{tpu_custom_call.1} parent=1 // pred_check_branch
      %46 = sbr.rel (0) target = $region17
    $region16: #{tpu_custom_call.1} parent=1 // pred_region
      %47 = dma.done [#allocation3], 64
    $region17: #{tpu_custom_call.1} parent=1 // pred_fallthru
      _
    // Predicated region
    $region18: #{tpu_custom_call.1} parent=1 // pred_check
      _
    $region19: #{tpu_custom_call.1} parent=1 // pred_check_branch
      %49 = sbr.rel (0) target = $region21
    $region20: #{tpu_custom_call.1} parent=1 // pred_region
      %50 = dma.done [#allocation6], 3072
    $region21: #{tpu_custom_call.1} parent=1 // pred_fallthru
      _
    // Predicated region
    $region22: #{tpu_custom_call.1} parent=1 // pred_check
      _
    $region23: #{tpu_custom_call.1} parent=1 // pred_check_branch
      %52 = sbr.rel (0) target = $region25
    $region24: #{tpu_custom_call.1} parent=1 // pred_region
      %53 = dma.done [#allocation6], 192
    $region25: #{tpu_custom_call.1} parent=1 // pred_fallthru
      _
    %v54 = vld [vmem:[#allocation2] sm:$0xf]
    %v55 = vld [vmem:[#allocation5] sm:$0xff]
    %v56 = vld [vmem:[#allocation5 + $0x8] sm:$0xff]
    %v57 = vld [vmem:[#allocation5 + $0x10] sm:$0xff]
    %v58 = vld [vmem:[#allocation5 + $0x18] sm:$0xff]
    %v59 = vld [vmem:[#allocation5 + $0x20] sm:$0xff]
    %v60 = vld [vmem:[#allocation5 + $0x28] sm:$0xff]
    %v61 = vld [vmem:[#allocation5 + $0x30] sm:$0xff]
    %v62 = vld [vmem:[#allocation5 + $0x38] sm:$0xff]
    %v63 = vld [vmem:[#allocation7] sm:$0x7]
    %v64 = vlaneseq
    %v65 = vshrl.u32 %v64, 7
    %v66 = vsub.s32 0, %v65
    %v67 = vrot.slane %v63, %v66
    %vm68 = vcmask 523264
    %v70 = vsel %vm68, %v54, 0
    %72 = vmatprep.subr.mxu0 0.0
    %73 = vmatpush1.msra.mxu0 0.0
    %74 = vmatprep.subr.mxu0 0.0
    %75 = vmatpush1.msra.mxu0 0.0
    %76 = vmatprep.subr.mxu0 0.0
    %77 = vmatpush1.msra.mxu0 0.0
    %78 = vmatprep.subr.mxu0 0.0
    %79 = vmatpush1.msra.mxu0 0.0
    %80 = vmatprep.subr.mxu0 0.0
    %81 = vmatpush1.msra.mxu0 0.0
    %82 = vmatprep.subr.mxu0 0.0
    %83 = vmatpush1.msra.mxu0 0.0
    %84 = vmatprep.subr.mxu0 0.0
    %85 = vmatpush1.msra.mxu0 0.0
    %86 = vmatprep.subr.mxu0 0.0
    %87 = vmatpush1.msra.mxu0 0.0
    %88 = vmatprep.subr.mxu0 0.0
    %89 = vmatpush1.msra.mxu0 %v62
    %90 = vmatprep.subr.mxu0 0.0
    %91 = vmatpush1.msra.mxu0 %v61
    %92 = vmatprep.subr.mxu0 0.0
    %93 = vmatpush1.msra.mxu0 %v60
    %94 = vmatprep.subr.mxu0 0.0
    %95 = vmatpush1.msra.mxu0 %v59
    %96 = vmatprep.subr.mxu0 0.0
    %97 = vmatpush1.msra.mxu0 %v58
    %98 = vmatprep.subr.mxu0 0.0
    %99 = vmatpush1.msra.mxu0 %v57
    %100 = vmatprep.subr.mxu0 0.0
    %101 = vmatpush1.msra.mxu0 %v56
    %102 = vmatprep.subr.mxu0 0.0
    %103 = vmatpush1.msra.mxu0 %v55
    %104 = vmatprep.subr.mxu0 0.0
    %105 = vmatpush2.msra.mxu0 0.0
    %106 = vmatprep.subr.mxu0 0.0
    %107 = vmatpush2.msra.mxu0 0.0
    %108 = vmatprep.subr.mxu0 0.0
    %109 = vmatpush2.msra.mxu0 0.0
    %110 = vmatprep.subr.mxu0 0.0
    %111 = vmatpush2.msra.mxu0 0.0
    %112 = vmatprep.subr.mxu0 0.0
    %113 = vmatpush2.msra.mxu0 0.0
    %114 = vmatprep.subr.mxu0 0.0
    %115 = vmatpush2.msra.mxu0 0.0
    %116 = vmatprep.subr.mxu0 0.0
    %117 = vmatpush2.msra.mxu0 0.0
    %118 = vmatprep.subr.mxu0 0.0
    %119 = vmatpush2.msra.mxu0 0.0
    %120 = vmatprep.subr.mxu0 0.0
    %121 = vmatpush2.msra.mxu0 0.0
    %122 = vmatprep.subr.mxu0 0.0
    %123 = vmatpush2.msra.mxu0 0.0
    %124 = vmatprep.subr.mxu0 0.0
    %125 = vmatpush2.msra.mxu0 0.0
    %126 = vmatprep.subr.mxu0 0.0
    %127 = vmatpush2.msra.mxu0 0.0
    %128 = vmatprep.subr.mxu0 0.0
    %129 = vmatpush2.msra.mxu0 0.0
    %130 = vmatprep.subr.mxu0 0.0
    %131 = vmatpush2.msra.mxu0 0.0
    %132 = vmatprep.subr.mxu0 0.0
    %133 = vmatpush2.msra.mxu0 0.0
    %134 = vmatprep.subr.mxu0 0.0
    %135 = vmatpush2.msra.mxu0 0.0
    %136 = vmatprep.mubr.f32.mxu0 0.0
    %137 = vmatmul.mubr.f32.gmra.mxu0 %v70
    %v138 = vpop.f32.mrf.mxu0
    %v139 = vadd.f32 %v67, %v138
    %v140 = vpop.f32.mrf.mxu0
    %141 = vdwg.mxu0
    %vm142 = vcmask 519168
    %v143 = vsel %vm142, %v139, 0.0
    %v144 = vrot.slane %v143, 4
    %v145 = vadd.f32 %v143, %v144
    %v146 = vrot.slane %v145, 2
    %v147 = vadd.f32 %v145, %v146
    %v148 = vrot.slane %v147, 1
    %v149 = vadd.f32 %v147, %v148
    %v150 = vrcp.pop 4.0
    %v151 = vmul.f32 %v149, %v150
    %v152 = vmul.f32 %v139, %v139
    %v153 = vsel %vm142, %v152, 0.0
    %v154 = vrot.slane %v153, 4
    %v155 = vadd.f32 %v153, %v154
    %v156 = vrot.slane %v155, 2
    %v157 = vadd.f32 %v155, %v156
    %v158 = vrot.slane %v157, 1
    %v159 = vadd.f32 %v157, %v158
    %v160 = vmul.f32 %v159, %v150
    %v161 = vmul.f32 %v151, %v151
    %v162 = vsub.f32 %v160, %v161
    %v163 = vadd.f32 %v162, 1e-05
    %v164 = vrsqrt.pop %v163
    %v165 = vmul.f32 %v164, %v63
    %v166 = vmul.f32 %v151, %v165
    %v168 = vrot.slane %v166, 7
    %v170 = vsub.f32 %v63, %v168
    %v171 = vlaneseq
    %v172 = vshrl.u32 %v171, 7
    %v173 = vsub.s32 1, %v172
    %v174 = vrot.slane %v165, %v173
    %v175 = vmul.f32 %v139, %v174
    %v176 = vlaneseq
    %v177 = vshrl.u32 %v176, 7
    %v178 = vsub.s32 2, %v177
    %v179 = vrot.slane %v170, %v178
    %v180 = vadd.f32 %v175, %v179
    %vm181 = vcmp.gt.f32.partialorder %v180, 0.0
    %v182 = vmul.f32 %v180, 0.2
    %v183 = vsel %vm181, %v180, %v182
    %s184 = scalar_lea.vmem [#allocation5], 64
    %v185 = vld [vmem:[%s184] sm:$0xff]
    %v186 = vld [vmem:[%s184 + $0x8] sm:$0xff]
    %v187 = vld [vmem:[%s184 + $0x10] sm:$0xff]
    %v188 = vld [vmem:[%s184 + $0x18] sm:$0xff]
    %v189 = vld [vmem:[%s184 + $0x20] sm:$0xff]
    %v190 = vld [vmem:[%s184 + $0x28] sm:$0xff]
    %v191 = vld [vmem:[%s184 + $0x30] sm:$0xff]
    %v192 = vld [vmem:[%s184 + $0x38] sm:$0xff]
    %s193 = scalar_lea.vmem [#allocation7], 4
    %v194 = vld [vmem:[%s193] sm:$0x7]
    %v195 = vlaneseq
    %v196 = vshrl.u32 %v195, 7
    %v197 = vsub.s32 0, %v196
    %v198 = vrot.slane %v194, %v197
    %v200 = vsel %vm68, %v183, 0
    %202 = vmatprep.subr.mxu0 0.0
    %203 = vmatpush1.msra.mxu0 0.0
    %204 = vmatprep.subr.mxu0 0.0
    %205 = vmatpush1.msra.mxu0 0.0
    %206 = vmatprep.subr.mxu0 0.0
    %207 = vmatpush1.msra.mxu0 0.0
    %208 = vmatprep.subr.mxu0 0.0
    %209 = vmatpush1.msra.mxu0 0.0
    %210 = vmatprep.subr.mxu0 0.0
    %211 = vmatpush1.msra.mxu0 0.0
    %212 = vmatprep.subr.mxu0 0.0
    %213 = vmatpush1.msra.mxu0 0.0
    %214 = vmatprep.subr.mxu0 0.0
    %215 = vmatpush1.msra.mxu0 0.0
    %216 = vmatprep.subr.mxu0 0.0
    %217 = vmatpush1.msra.mxu0 0.0
    %218 = vmatprep.subr.mxu0 0.0
    %219 = vmatpush1.msra.mxu0 %v192
    %220 = vmatprep.subr.mxu0 0.0
    %221 = vmatpush1.msra.mxu0 %v191
    %222 = vmatprep.subr.mxu0 0.0
    %223 = vmatpush1.msra.mxu0 %v190
    %224 = vmatprep.subr.mxu0 0.0
    %225 = vmatpush1.msra.mxu0 %v189
    %226 = vmatprep.subr.mxu0 0.0
    %227 = vmatpush1.msra.mxu0 %v188
    %228 = vmatprep.subr.mxu0 0.0
    %229 = vmatpush1.msra.mxu0 %v187
    %230 = vmatprep.subr.mxu0 0.0
    %231 = vmatpush1.msra.mxu0 %v186
    %232 = vmatprep.subr.mxu0 0.0
    %233 = vmatpush1.msra.mxu0 %v185
    %234 = vmatprep.subr.mxu0 0.0
    %235 = vmatpush2.msra.mxu0 0.0
    %236 = vmatprep.subr.mxu0 0.0
    %237 = vmatpush2.msra.mxu0 0.0
    %238 = vmatprep.subr.mxu0 0.0
    %239 = vmatpush2.msra.mxu0 0.0
    %240 = vmatprep.subr.mxu0 0.0
    %241 = vmatpush2.msra.mxu0 0.0
    %242 = vmatprep.subr.mxu0 0.0
    %243 = vmatpush2.msra.mxu0 0.0
    %244 = vmatprep.subr.mxu0 0.0
    %245 = vmatpush2.msra.mxu0 0.0
    %246 = vmatprep.subr.mxu0 0.0
    %247 = vmatpush2.msra.mxu0 0.0
    %248 = vmatprep.subr.mxu0 0.0
    %249 = vmatpush2.msra.mxu0 0.0
    %250 = vmatprep.subr.mxu0 0.0
    %251 = vmatpush2.msra.mxu0 0.0
    %252 = vmatprep.subr.mxu0 0.0
    %253 = vmatpush2.msra.mxu0 0.0
    %254 = vmatprep.subr.mxu0 0.0
    %255 = vmatpush2.msra.mxu0 0.0
    %256 = vmatprep.subr.mxu0 0.0
    %257 = vmatpush2.msra.mxu0 0.0
    %258 = vmatprep.subr.mxu0 0.0
    %259 = vmatpush2.msra.mxu0 0.0
    %260 = vmatprep.subr.mxu0 0.0
    %261 = vmatpush2.msra.mxu0 0.0
    %262 = vmatprep.subr.mxu0 0.0
    %263 = vmatpush2.msra.mxu0 0.0
    %264 = vmatprep.subr.mxu0 0.0
    %265 = vmatpush2.msra.mxu0 0.0
    %266 = vmatprep.mubr.f32.mxu0 0.0
    %267 = vmatmul.mubr.f32.gmra.mxu0 %v200
    %v268 = vpop.f32.mrf.mxu0
    %v269 = vadd.f32 %v198, %v268
    %v270 = vpop.f32.mrf.mxu0
    %271 = vdwg.mxu0
    %v272 = vsel %vm142, %v269, 0.0
    %v273 = vrot.slane %v272, 4
    %v274 = vadd.f32 %v272, %v273
    %v275 = vrot.slane %v274, 2
    %v276 = vadd.f32 %v274, %v275
    %v277 = vrot.slane %v276, 1
    %v278 = vadd.f32 %v276, %v277
    %v279 = vmul.f32 %v278, %v150
    %v280 = vmul.f32 %v269, %v269
    %v281 = vsel %vm142, %v280, 0.0
    %v282 = vrot.slane %v281, 4
    %v283 = vadd.f32 %v281, %v282
    %v284 = vrot.slane %v283, 2
    %v285 = vadd.f32 %v283, %v284
    %v286 = vrot.slane %v285, 1
    %v287 = vadd.f32 %v285, %v286
    %v288 = vmul.f32 %v287, %v150
    %v289 = vmul.f32 %v279, %v279
    %v290 = vsub.f32 %v288, %v289
    %v291 = vadd.f32 %v290, 1e-05
    %v292 = vrsqrt.pop %v291
    %v293 = vmul.f32 %v292, %v194
    %v294 = vmul.f32 %v279, %v293
    %v296 = vrot.slane %v294, 7
    %v298 = vsub.f32 %v194, %v296
    %v299 = vlaneseq
    %v300 = vshrl.u32 %v299, 7
    %v301 = vsub.s32 1, %v300
    %v302 = vrot.slane %v293, %v301
    %v303 = vmul.f32 %v269, %v302
    %v304 = vlaneseq
    %v305 = vshrl.u32 %v304, 7
    %v306 = vsub.s32 2, %v305
    %v307 = vrot.slane %v298, %v306
    %v308 = vadd.f32 %v303, %v307
    %vm309 = vcmp.gt.f32.partialorder %v308, 0.0
    %v310 = vmul.f32 %v308, 0.2
    %v311 = vsel %vm309, %v308, %v310
    %s312 = scalar_lea.vmem [#allocation5], 128
    %v313 = vld [vmem:[%s312] sm:$0xff]
    %v314 = vld [vmem:[%s312 + $0x8] sm:$0xff]
    %v315 = vld [vmem:[%s312 + $0x10] sm:$0xff]
    %v316 = vld [vmem:[%s312 + $0x18] sm:$0xff]
    %v317 = vld [vmem:[%s312 + $0x20] sm:$0xff]
    %v318 = vld [vmem:[%s312 + $0x28] sm:$0xff]
    %v319 = vld [vmem:[%s312 + $0x30] sm:$0xff]
    %v320 = vld [vmem:[%s312 + $0x38] sm:$0xff]
    %s321 = scalar_lea.vmem [#allocation7], 8
    %v322 = vld [vmem:[%s321] sm:$0x7]
    %v323 = vlaneseq
    %v324 = vshrl.u32 %v323, 7
    %v325 = vsub.s32 0, %v324
    %v326 = vrot.slane %v322, %v325
    %v328 = vsel %vm68, %v311, 0
    %330 = vmatprep.subr.mxu0 0.0
    %331 = vmatpush1.msra.mxu0 0.0
    %332 = vmatprep.subr.mxu0 0.0
    %333 = vmatpush1.msra.mxu0 0.0
    %334 = vmatprep.subr.mxu0 0.0
    %335 = vmatpush1.msra.mxu0 0.0
    %336 = vmatprep.subr.mxu0 0.0
    %337 = vmatpush1.msra.mxu0 0.0
    %338 = vmatprep.subr.mxu0 0.0
    %339 = vmatpush1.msra.mxu0 0.0
    %340 = vmatprep.subr.mxu0 0.0
    %341 = vmatpush1.msra.mxu0 0.0
    %342 = vmatprep.subr.mxu0 0.0
    %343 = vmatpush1.msra.mxu0 0.0
    %344 = vmatprep.subr.mxu0 0.0
    %345 = vmatpush1.msra.mxu0 0.0
    %346 = vmatprep.subr.mxu0 0.0
    %347 = vmatpush1.msra.mxu0 %v320
    %348 = vmatprep.subr.mxu0 0.0
    %349 = vmatpush1.msra.mxu0 %v319
    %350 = vmatprep.subr.mxu0 0.0
    %351 = vmatpush1.msra.mxu0 %v318
    %352 = vmatprep.subr.mxu0 0.0
    %353 = vmatpush1.msra.mxu0 %v317
    %354 = vmatprep.subr.mxu0 0.0
    %355 = vmatpush1.msra.mxu0 %v316
    %356 = vmatprep.subr.mxu0 0.0
    %357 = vmatpush1.msra.mxu0 %v315
    %358 = vmatprep.subr.mxu0 0.0
    %359 = vmatpush1.msra.mxu0 %v314
    %360 = vmatprep.subr.mxu0 0.0
    %361 = vmatpush1.msra.mxu0 %v313
    %362 = vmatprep.subr.mxu0 0.0
    %363 = vmatpush2.msra.mxu0 0.0
    %364 = vmatprep.subr.mxu0 0.0
    %365 = vmatpush2.msra.mxu0 0.0
    %366 = vmatprep.subr.mxu0 0.0
    %367 = vmatpush2.msra.mxu0 0.0
    %368 = vmatprep.subr.mxu0 0.0
    %369 = vmatpush2.msra.mxu0 0.0
    %370 = vmatprep.subr.mxu0 0.0
    %371 = vmatpush2.msra.mxu0 0.0
    %372 = vmatprep.subr.mxu0 0.0
    %373 = vmatpush2.msra.mxu0 0.0
    %374 = vmatprep.subr.mxu0 0.0
    %375 = vmatpush2.msra.mxu0 0.0
    %376 = vmatprep.subr.mxu0 0.0
    %377 = vmatpush2.msra.mxu0 0.0
    %378 = vmatprep.subr.mxu0 0.0
    %379 = vmatpush2.msra.mxu0 0.0
    %380 = vmatprep.subr.mxu0 0.0
    %381 = vmatpush2.msra.mxu0 0.0
    %382 = vmatprep.subr.mxu0 0.0
    %383 = vmatpush2.msra.mxu0 0.0
    %384 = vmatprep.subr.mxu0 0.0
    %385 = vmatpush2.msra.mxu0 0.0
    %386 = vmatprep.subr.mxu0 0.0
    %387 = vmatpush2.msra.mxu0 0.0
    %388 = vmatprep.subr.mxu0 0.0
    %389 = vmatpush2.msra.mxu0 0.0
    %390 = vmatprep.subr.mxu0 0.0
    %391 = vmatpush2.msra.mxu0 0.0
    %392 = vmatprep.subr.mxu0 0.0
    %393 = vmatpush2.msra.mxu0 0.0
    %394 = vmatprep.mubr.f32.mxu0 0.0
    %395 = vmatmul.mubr.f32.gmra.mxu0 %v328
    %v396 = vpop.f32.mrf.mxu0
    %v397 = vadd.f32 %v326, %v396
    %v398 = vpop.f32.mrf.mxu0
    %399 = vdwg.mxu0
    %v400 = vsel %vm142, %v397, 0.0
    %v401 = vrot.slane %v400, 4
    %v402 = vadd.f32 %v400, %v401
    %v403 = vrot.slane %v402, 2
    %v404 = vadd.f32 %v402, %v403
    %v405 = vrot.slane %v404, 1
    %v406 = vadd.f32 %v404, %v405
    %v407 = vmul.f32 %v406, %v150
    %v408 = vmul.f32 %v397, %v397
    %v409 = vsel %vm142, %v408, 0.0
    %v410 = vrot.slane %v409, 4
    %v411 = vadd.f32 %v409, %v410
    %v412 = vrot.slane %v411, 2
    %v413 = vadd.f32 %v411, %v412
    %v414 = vrot.slane %v413, 1
    %v415 = vadd.f32 %v413, %v414
    %v416 = vmul.f32 %v415, %v150
    %v417 = vmul.f32 %v407, %v407
    %v418 = vsub.f32 %v416, %v417
    %v419 = vadd.f32 %v418, 1e-05
    %v420 = vrsqrt.pop %v419
    %v421 = vmul.f32 %v420, %v322
    %v422 = vmul.f32 %v407, %v421
    %v424 = vrot.slane %v422, 7
    %v426 = vsub.f32 %v322, %v424
    %v427 = vlaneseq
    %v428 = vshrl.u32 %v427, 7
    %v429 = vsub.s32 1, %v428
    %v430 = vrot.slane %v421, %v429
    %v431 = vmul.f32 %v397, %v430
    %v432 = vlaneseq
    %v433 = vshrl.u32 %v432, 7
    %v434 = vsub.s32 2, %v433
    %v435 = vrot.slane %v426, %v434
    %v436 = vadd.f32 %v431, %v435
    %v437 = vtanh.pop %v436
    %438 = vst.msk [vmem:[#allocation8] sm:$0xf] %vm142, %v437
    // Predicated region
    $region26: #{tpu_custom_call.1} parent=1 // pred_check
      _
    $region27: #{tpu_custom_call.1} parent=1 // pred_check_branch
      %440 = sbr.rel (0) target = $region29
    $region28: #{tpu_custom_call.1} parent=1 // pred_region
      %s442 = ssub.s32 64, 64
      %443 = vsyncadd [#allocation4], %s442
      %s445 = sshll.u32 [#allocation8], 4
      %s446 = int_to_ptr.vmem [resolvable:$true] %s445
      %448 = dma.vmem_to_hbm [thread:$0]  %s446, 64, %s3, [#allocation4]
    $region29: #{tpu_custom_call.1} parent=1 // pred_fallthru
      _
    // Predicated region
    $region30: #{tpu_custom_call.1} parent=1 // pred_check
      _
    $region31: #{tpu_custom_call.1} parent=1 // pred_check_branch
      %450 = sbr.rel (0) target = $region33
    $region32: #{tpu_custom_call.1} parent=1 // pred_region
      %451 = dma.done [#allocation4], 64
    $region33: #{tpu_custom_call.1} parent=1 // pred_fallthru
      _
    %452 = vsyncpa [#allocation3], 1
    %453 = vsyncpa [#allocation6], 1
    %454 = vsyncpa [#allocation4], 1

</llo_original>
